<compile_context>
chip_gen: v5e
topology: v5e:2x2
jax: 0.10.0
libtpu: 0.0.40
codegen_flags: <defaults>
</compile_context>

<pallas_src>
import functools
import math

import jax
import jax.numpy as jnp
from jax.experimental import pallas as pl
from jax.experimental.pallas import tpu as pltpu


# ----------------------------------------------------------------------------
# Pallas kernel: fused base linear + LoRA path for one AROMALinear layer.
# Grid: (M/tm, N/tn, K/tk); K is the reduction axis (last, "arbitrary").
# ----------------------------------------------------------------------------
def _aroma_linear_kernel(x_ref, wt_ref, bias_ref, at_ref, bt_ref, o_ref,
                         acc_ref, mid_ref, *, activation):
    k = pl.program_id(2)

    @pl.when(k == 0)
    def _():
        acc_ref[...] = jnp.zeros_like(acc_ref)
        mid_ref[...] = jnp.zeros_like(mid_ref)

    x = x_ref[...]                                                     # (tm, tk)
    # Base path: accumulate x @ W^T over K tiles (frozen pretrained weight).
    acc_ref[...] += jnp.dot(x, wt_ref[...],
                            preferred_element_type=jnp.float32)        # (tm, tn)
    # LoRA intermediate: accumulate x @ A^T over K tiles (dropout = identity).
    mid_ref[...] += jnp.dot(x, at_ref[...],
                            preferred_element_type=jnp.float32)        # (tm, r)

    @pl.when(k == pl.num_programs(2) - 1)
    def _():
        # scale is pre-folded into B^T host-side.
        lora = jnp.dot(mid_ref[...].astype(bt_ref.dtype), bt_ref[...],
                       preferred_element_type=jnp.float32)             # (tm, tn)
        out = acc_ref[...] + bias_ref[...] + lora
        if activation == "relu":
            out = jnp.maximum(out, 0.0)                                # fused epilogue
        o_ref[...] = out.astype(o_ref.dtype)


def _round_up(x, m):
    return (x + m - 1) // m * m


def _pad2d(a, rows, cols, dtype):
    if a.shape == (rows, cols) and a.dtype == dtype:
        return a
    out = jnp.zeros((rows, cols), dtype)
    return out.at[: a.shape[0], : a.shape[1]].set(a.astype(dtype))


def aroma_linear(x2d, weight, bias, lora_A, lora_B, *, lora_alpha, r,
                 activation=None, tm_max=256, tn_max=256, tk_max=512):
    """Fused AROMALinear forward.

    x2d:     (M, in_features)            activations
    weight:  (out_features, in_features) frozen base weight (torch layout)
    bias:    (out_features,)             frozen base bias
    lora_A:  (r, in_features)            lora_A.weight (torch layout)
    lora_B:  (out_features, r)           lora_B.weight (torch layout)
    returns: (M, out_features)
    """
    M, in_f = x2d.shape
    out_f = weight.shape[0]
    assert lora_A.shape == (r, in_f)
    assert lora_B.shape == (out_f, r)
    scale = float(lora_alpha) / float(r)

    # --- Tile sizes: as large as fits, clipped to padded extents. ---
    # tm: multiple of 8 sublanes; tn/tk: multiples of 128 lanes (lane-dense
    # unmasked stores / aligned loads) unless the whole dim is smaller.
    tm = min(tm_max, _round_up(M, 8))
    tk = min(tk_max, _round_up(in_f, 128))
    tn = min(tn_max, _round_up(out_f, 128))

    Mp = _round_up(M, tm)
    Kp = _round_up(in_f, tk)
    Np = _round_up(out_f, tn)

    dt = x2d.dtype
    # Host-side weight prep (one-time per layer in real usage; zero padding of
    # K/N contributes exactly zero to the matmuls).
    wt = _pad2d(weight.T, Kp, Np, dt)                       # (Kp, Np)
    at = _pad2d(lora_A.T, Kp, r, dt)                        # (Kp, r)
    bt = _pad2d((lora_B * scale).T, r, Np, dt)              # (r, Np), scale folded
    bias2d = _pad2d(bias.reshape(1, out_f), 1, Np, jnp.float32)
    xp = _pad2d(x2d, Mp, Kp, dt)

    grid = (Mp // tm, Np // tn, Kp // tk)

    # Rough VMEM budget: double-buffered inputs/output + f32 accumulators.
    bpe = jnp.dtype(dt).itemsize
    est = (2 * (tm * tk + tk * tn + tn + tk * r + r * tn + tm * tn) * bpe
           + tm * tn * 4 + tm * r * 4)
    vmem_limit = int(min(max(2 * est, 32 * 1024 * 1024), 64 * 1024 * 1024))

    kernel = functools.partial(_aroma_linear_kernel, activation=activation)

    out = pl.pallas_call(
        kernel,
        out_shape=jax.ShapeDtypeStruct((Mp, Np), dt),
        grid_spec=pltpu.PrefetchScalarGridSpec(
            num_scalar_prefetch=0,
            grid=grid,
            in_specs=[
                pl.BlockSpec((tm, tk), lambda i, j, k: (i, k)),    # x tile
                pl.BlockSpec((tk, tn), lambda i, j, k: (k, j)),    # W^T tile
                pl.BlockSpec((1, tn), lambda i, j, k: (0, j)),     # bias tile
                pl.BlockSpec((tk, r), lambda i, j, k: (k, 0)),     # A^T tile
                pl.BlockSpec((r, tn), lambda i, j, k: (0, j)),     # scaled B^T tile
            ],
            out_specs=pl.BlockSpec((tm, tn), lambda i, j, k: (i, j)),
            scratch_shapes=[
                pltpu.VMEM((tm, tn), jnp.float32),   # base accumulator
                pltpu.VMEM((tm, r), jnp.float32),    # LoRA intermediate accumulator
            ],
        ),
        compiler_params=pltpu.CompilerParams(
            dimension_semantics=("parallel", "parallel", "arbitrary"),
            vmem_limit_bytes=vmem_limit,
        ),
    )(xp, wt, bias2d, at, bt)

    if Mp != M or Np != out_f:
        out = out[:M, :out_f]
    return out


# ----------------------------------------------------------------------------
# Parameter construction (deterministic, mirrors AROMALinear.__init__)
# ----------------------------------------------------------------------------
def init_aroma_linear_params(key, in_features, out_features, r):
    """keep_original_weights=True: base weight comes from the wrapped Linear.
    lora_A: kaiming_uniform_(a=sqrt(5)) -> U(-1/sqrt(fan_in), 1/sqrt(fan_in))
    lora_B: zeros. bias: original module bias (random here for the toy model).
    """
    kw, kb, ka = jax.random.split(key, 3)
    w_bound = 1.0 / math.sqrt(in_features)
    weight = jax.random.uniform(kw, (out_features, in_features),
                                jnp.float32, -w_bound, w_bound)
    bias = jax.random.uniform(kb, (out_features,), jnp.float32, -w_bound, w_bound)
    a_bound = 1.0 / math.sqrt(in_features)   # kaiming_uniform with a=sqrt(5)
    lora_A = jax.random.uniform(ka, (r, in_features), jnp.float32, -a_bound, a_bound)
    lora_B = jnp.zeros((out_features, r), jnp.float32)
    return dict(weight=weight, bias=bias, lora_A=lora_A, lora_B=lora_B)


# ----------------------------------------------------------------------------
# Wrapped model: a tiny 2-layer MLP whose Linear layers were replaced by
# AROMALinear (what AROMAModel.__init__ does for target_modules).
# AROMAModel.forward just forwards to the wrapped model; the inter-layer ReLU
# is fused into the first kernel's epilogue.
# ----------------------------------------------------------------------------
def aroma_model_forward(params, x, *, lora_alpha, r, **tile_kwargs):
    B, S, H = x.shape
    x2d = x.reshape(B * S, H)
    p0 = params["fc1"]
    h = aroma_linear(x2d, p0["weight"], p0["bias"], p0["lora_A"], p0["lora_B"],
                     lora_alpha=lora_alpha, r=r, activation="relu", **tile_kwargs)
    p1 = params["fc2"]
    y = aroma_linear(h, p1["weight"], p1["bias"], p1["lora_A"], p1["lora_B"],
                     lora_alpha=lora_alpha, r=r, **tile_kwargs)
    return y.reshape(B, S, -1)


def aroma_model_forward_ref(params, x, *, lora_alpha, r):
    """Pure-JAX reference matching the PyTorch forward semantics."""
    scale = lora_alpha / r

    def lin(p, h):
        base = h @ p["weight"].T + p["bias"]
        lora = (h @ p["lora_A"].T) @ p["lora_B"].T
        return base + lora * scale

    B, S, H = x.shape
    h = lin(params["fc1"], x.reshape(B * S, H))
    h = jax.nn.relu(h)
    y = lin(params["fc2"], h)
    return y.reshape(B, S, -1)


if __name__ == "__main__":
    # --- Toy shapes consistent with the module: batch=2, seq=8, hidden=32, r=8 ---
    batch, seq, hidden, r, lora_alpha = 2, 8, 32, 8, 32

    key = jax.random.PRNGKey(0)
    kx, k1, k2, kb = jax.random.split(key, 4)

    x = jax.random.normal(kx, (batch, seq, hidden), jnp.float32)
    params = {
        "fc1": init_aroma_linear_params(k1, hidden, hidden, r),
        "fc2": init_aroma_linear_params(k2, hidden, hidden, r),
    }
    # Exercise the LoRA matmul path numerically as well (after a training step
    # lora_B is no longer zero); the init-time state (zeros) is also checked.
    params_nonzero = {name: dict(p) for name, p in params.items()}
    params_nonzero["fc1"]["lora_B"] = 0.02 * jax.random.normal(
        kb, (hidden, r), jnp.float32)

    for p in (params, params_nonzero):
        out = jax.block_until_ready(
            aroma_model_forward(p, x, lora_alpha=lora_alpha, r=r))
        ref = aroma_model_forward_ref(p, x, lora_alpha=lora_alpha, r=r)
        assert out.shape == (batch, seq, hidden)
        assert jnp.allclose(out, ref, atol=1e-5, rtol=1e-5), "mismatch (toy shapes)"

    # --- Multi-tile check: exercises the M/N/K tiling + f32 accumulators ---
    b2, s2, h2, r2 = 2, 64, 256, 16
    kx2, k3, k4, kb2 = jax.random.split(jax.random.PRNGKey(1), 4)
    x2 = jax.random.normal(kx2, (b2, s2, h2), jnp.float32)
    params2 = {
        "fc1": init_aroma_linear_params(k3, h2, h2, r2),
        "fc2": init_aroma_linear_params(k4, h2, h2, r2),
    }
    params2["fc1"]["lora_B"] = 0.02 * jax.random.normal(kb2, (h2, r2), jnp.float32)
    out2 = jax.block_until_ready(
        aroma_model_forward(params2, x2, lora_alpha=lora_alpha, r=r2,
                            tm_max=64, tn_max=128, tk_max=128))  # force grid (2,2,2)
    ref2 = aroma_model_forward_ref(params2, x2, lora_alpha=lora_alpha, r=r2)
    assert out2.shape == (b2, s2, h2)
    assert jnp.allclose(out2, ref2, atol=1e-3, rtol=1e-3), "mismatch (tiled shapes)"

    print("KERNEL_OK")
</pallas_src>

<mosaic_0001>
module attributes {stable_mosaic.version = 11 : i64} {
  func.func @_aroma_linear_kernel(%arg0: i32, %arg1: i32, %arg2: i32, %arg3: memref<16x128xf32, #tpu.memory_space<vmem>>, %arg4: memref<128x128xf32, #tpu.memory_space<vmem>>, %arg5: memref<1x128xf32, #tpu.memory_space<vmem>>, %arg6: memref<128x8xf32, #tpu.memory_space<vmem>>, %arg7: memref<8x128xf32, #tpu.memory_space<vmem>>, %arg8: memref<16x128xf32, #tpu.memory_space<vmem>>, %arg9: memref<16x128xf32, #tpu.memory_space<vmem>>, %arg10: memref<16x8xf32, #tpu.memory_space<vmem>>) attributes {dimension_semantics = [#tpu.dimension_semantics<parallel>, #tpu.dimension_semantics<parallel>, #tpu.dimension_semantics<arbitrary>], iteration_bounds = array<i64: 1, 1, 1>, scalar_prefetch = 0 : i64, scratch_operands = 2 : i64, tpu.core_type = #tpu.core_type<tc>, window_params = [{transform_indices = @transform_0, window_bounds = array<i64: 16, 128>}, {transform_indices = @transform_1, window_bounds = array<i64: 128, 128>}, {transform_indices = @transform_2, window_bounds = array<i64: 1, 128>}, {transform_indices = @transform_3, window_bounds = array<i64: 128, 8>}, {transform_indices = @transform_4, window_bounds = array<i64: 8, 128>}, {transform_indices = @transform_5, window_bounds = array<i64: 16, 128>}]} {
    %c0_i32 = arith.constant 0 : i32
    %0 = arith.cmpi eq, %arg2, %c0_i32 : i32
    %1 = arith.extui %0 : i1 to i32
    %c0_i32_0 = arith.constant 0 : i32
    %2 = arith.cmpi ne, %1, %c0_i32_0 : i32
    scf.if %2 {
      %cst_17 = arith.constant 0.000000e+00 : f32
      %17 = vector.broadcast %cst_17 : f32 to vector<16x128xf32>
      %c0_18 = arith.constant 0 : index
      %c0_19 = arith.constant 0 : index
      %18 = vector.load %arg9[%c0_18, %c0_19] : memref<16x128xf32, #tpu.memory_space<vmem>>, vector<16x128xf32>
      tpu.vector_store %arg9[%c0_18, %c0_19], %17 {strides = array<i32>} : memref<16x128xf32, #tpu.memory_space<vmem>>, vector<16x128xf32>,
      %cst_20 = arith.constant 0.000000e+00 : f32
      %19 = vector.broadcast %cst_20 : f32 to vector<16x8xf32>
      %c0_21 = arith.constant 0 : index
      %c0_22 = arith.constant 0 : index
      %20 = vector.load %arg10[%c0_21, %c0_22] : memref<16x8xf32, #tpu.memory_space<vmem>>, vector<16x8xf32>
      tpu.vector_store %arg10[%c0_21, %c0_22], %19 {strides = array<i32>} : memref<16x8xf32, #tpu.memory_space<vmem>>, vector<16x8xf32>,
    } else {
    }
    %c0 = arith.constant 0 : index
    %c0_1 = arith.constant 0 : index
    %3 = vector.load %arg3[%c0, %c0_1] : memref<16x128xf32, #tpu.memory_space<vmem>>, vector<16x128xf32>
    %c0_2 = arith.constant 0 : index
    %c0_3 = arith.constant 0 : index
    %4 = vector.load %arg9[%c0_2, %c0_3] : memref<16x128xf32, #tpu.memory_space<vmem>>, vector<16x128xf32>
    %c0_4 = arith.constant 0 : index
    %c0_5 = arith.constant 0 : index
    %5 = vector.load %arg4[%c0_4, %c0_5] : memref<128x128xf32, #tpu.memory_space<vmem>>, vector<128x128xf32>
    %cst = arith.constant dense<0.000000e+00> : vector<16x128xf32>
    %6 = tpu.matmul %3, %5, %cst {dimension_numbers = #tpu.dot_dimension_numbers<[1], [0], [0], [1], [0, 0, 1, 1], [], []>} : vector<16x128xf32>, vector<128x128xf32>, vector<16x128xf32> -> vector<16x128xf32>
    %7 = arith.addf %4, %6 : vector<16x128xf32>
    %c0_6 = arith.constant 0 : index
    %c0_7 = arith.constant 0 : index
    %8 = vector.load %arg9[%c0_6, %c0_7] : memref<16x128xf32, #tpu.memory_space<vmem>>, vector<16x128xf32>
    tpu.vector_store %arg9[%c0_6, %c0_7], %7 {strides = array<i32>} : memref<16x128xf32, #tpu.memory_space<vmem>>, vector<16x128xf32>,
    %c0_8 = arith.constant 0 : index
    %c0_9 = arith.constant 0 : index
    %9 = vector.load %arg10[%c0_8, %c0_9] : memref<16x8xf32, #tpu.memory_space<vmem>>, vector<16x8xf32>
    %c0_10 = arith.constant 0 : index
    %c0_11 = arith.constant 0 : index
    %10 = vector.load %arg6[%c0_10, %c0_11] : memref<128x8xf32, #tpu.memory_space<vmem>>, vector<128x8xf32>
    %cst_12 = arith.constant dense<0.000000e+00> : vector<16x8xf32>
    %11 = tpu.matmul %3, %10, %cst_12 {dimension_numbers = #tpu.dot_dimension_numbers<[1], [0], [0], [1], [0, 0, 1, 1], [], []>} : vector<16x128xf32>, vector<128x8xf32>, vector<16x8xf32> -> vector<16x8xf32>
    %12 = arith.addf %9, %11 : vector<16x8xf32>
    %c0_13 = arith.constant 0 : index
    %c0_14 = arith.constant 0 : index
    %13 = vector.load %arg10[%c0_13, %c0_14] : memref<16x8xf32, #tpu.memory_space<vmem>>, vector<16x8xf32>
    tpu.vector_store %arg10[%c0_13, %c0_14], %12 {strides = array<i32>} : memref<16x8xf32, #tpu.memory_space<vmem>>, vector<16x8xf32>,
    %c0_i32_15 = arith.constant 0 : i32
    %14 = arith.cmpi eq, %arg2, %c0_i32_15 : i32
    %15 = arith.extui %14 : i1 to i32
    %c0_i32_16 = arith.constant 0 : i32
    %16 = arith.cmpi ne, %15, %c0_i32_16 : i32
    scf.if %16 {
      %c0_17 = arith.constant 0 : index
      %c0_18 = arith.constant 0 : index
      %17 = vector.load %arg10[%c0_17, %c0_18] : memref<16x8xf32, #tpu.memory_space<vmem>>, vector<16x8xf32>
      %c0_19 = arith.constant 0 : index
      %c0_20 = arith.constant 0 : index
      %18 = vector.load %arg7[%c0_19, %c0_20] : memref<8x128xf32, #tpu.memory_space<vmem>>, vector<8x128xf32>
      %cst_21 = arith.constant dense<0.000000e+00> : vector<16x128xf32>
      %19 = tpu.matmul %17, %18, %cst_21 {dimension_numbers = #tpu.dot_dimension_numbers<[1], [0], [0], [1], [0, 0, 1, 1], [], []>} : vector<16x8xf32>, vector<8x128xf32>, vector<16x128xf32> -> vector<16x128xf32>
      %c0_22 = arith.constant 0 : index
      %c0_23 = arith.constant 0 : index
      %20 = vector.load %arg9[%c0_22, %c0_23] : memref<16x128xf32, #tpu.memory_space<vmem>>, vector<16x128xf32>
      %c0_24 = arith.constant 0 : index
      %c0_25 = arith.constant 0 : index
      %21 = vector.load %arg5[%c0_24, %c0_25] : memref<1x128xf32, #tpu.memory_space<vmem>>, vector<1x128xf32>
      %22 = vector.broadcast %21 : vector<1x128xf32> to vector<16x128xf32>
      %23 = arith.addf %20, %22 : vector<16x128xf32>
      %24 = arith.addf %23, %19 : vector<16x128xf32>
      %cst_26 = arith.constant 0.000000e+00 : f32
      %25 = vector.broadcast %cst_26 : f32 to vector<16x128xf32>
      %26 = arith.maximumf %24, %25 : vector<16x128xf32>
      %c0_27 = arith.constant 0 : index
      %c0_28 = arith.constant 0 : index
      %27 = vector.load %arg8[%c0_27, %c0_28] : memref<16x128xf32, #tpu.memory_space<vmem>>, vector<16x128xf32>
      tpu.vector_store %arg8[%c0_27, %c0_28], %26 {strides = array<i32>} : memref<16x128xf32, #tpu.memory_space<vmem>>, vector<16x128xf32>,
    } else {
    }
    return
  }
  func.func @transform_0(%arg0: i32, %arg1: i32, %arg2: i32) -> (i32, i32) {
    %c0_i32 = arith.constant 0 : i32
    return %arg0, %arg2 : i32, i32
  }
  func.func @transform_1(%arg0: i32, %arg1: i32, %arg2: i32) -> (i32, i32) {
    %c0_i32 = arith.constant 0 : i32
    return %arg2, %arg1 : i32, i32
  }
  func.func @transform_2(%arg0: i32, %arg1: i32, %arg2: i32) -> (i32, i32) {
    %c0_i32 = arith.constant 0 : i32
    %c0_i32_0 = arith.constant 0 : i32
    return %c0_i32, %arg1 : i32, i32
  }
  func.func @transform_3(%arg0: i32, %arg1: i32, %arg2: i32) -> (i32, i32) {
    %c0_i32 = arith.constant 0 : i32
    %c0_i32_0 = arith.constant 0 : i32
    return %arg2, %c0_i32 : i32, i32
  }
  func.func @transform_4(%arg0: i32, %arg1: i32, %arg2: i32) -> (i32, i32) {
    %c0_i32 = arith.constant 0 : i32
    %c0_i32_0 = arith.constant 0 : i32
    return %c0_i32, %arg1 : i32, i32
  }
  func.func @transform_5(%arg0: i32, %arg1: i32, %arg2: i32) -> (i32, i32) {
    %c0_i32 = arith.constant 0 : i32
    return %arg0, %arg1 : i32, i32
  }
}

</mosaic_0001>

<llo_original>
// kernel: tpu_custom_call.1
$region0: #{tpu_custom_call.1}
  #allocation0 [shape = 'u32[]', space=smem, size = 0x4, offset = 0x4, fixed_abs, tag = 'smem constant byte address 0x4 - core index']
  #allocation1 [shape = 'u32[72,128]{1,0:T(1,128)}', space=vmem, size = 0x9000, scoped, tag = 'internal scratch']
  #allocation2 [shape = 'f32[16,128]{1,0:T(8,128)}', space=vmem, size = 0x2000, scoped, tag = 'scratch operand']
  #allocation3 [shape = 'f32[16,8]{1,0:T(8,128)}', space=vmem, size = 0x2000, scoped, tag = 'scratch operand']
  %s0 = inlined_call_operand.hbm [shape: f32[16,128], index: 0, kind: input, shape index: {}]
  %s1 = inlined_call_operand.vmem [shape: f32[128,128], index: 1, kind: input, shape index: {}]
  %s2 = inlined_call_operand.vmem [shape: f32[1,128], index: 2, kind: input, shape index: {}]
  %s3 = inlined_call_operand.vmem [shape: f32[128,8], index: 3, kind: input, shape index: {}]
  %s4 = inlined_call_operand.vmem [shape: f32[8,128], index: 4, kind: input, shape index: {}]
  %s5 = inlined_call_operand.hbm [shape: f32[16,128], index: 5, kind: output, shape index: {}]
  %s6 = sld [smem:[#allocation0]]
  $region42: #{tpu_custom_call.1} parent=0
    _
  %s8 = ssub.s32 1, %s6
  %s9 = scalar_select 0, %s8, %s6
  $region1: #{tpu_custom_call.1} parent=0
    #allocation4 [shape = 'u8[8192]{0}', space=vmem, size = 0x2000, scoped, tag = 'input window, operand 0, single buffered']
    #allocation5 [shape = 's32[1]{0}', space=sflag, size = 0x4, scoped, tag = 'scoped memory for tpu_custom_call.1']
    #allocation6 [shape = 's32[1]{0}', space=sflag, size = 0x4, scoped, tag = 'scoped memory for tpu_custom_call.1']
    #allocation7 [shape = 'u8[8192]{0}', space=vmem, size = 0x2000, scoped, tag = 'output window, operand 0, single buffered']
    %10 = vsyncpa [#allocation5], 0
    %11 = vsyncpa [#allocation6], 0
    // Predicated region
    $region2: #{tpu_custom_call.1} parent=1 // pred_check
      _
    $region3: #{tpu_custom_call.1} parent=1 // pred_check_branch
      %13 = sbr.rel (0) target = $region5
    $region4: #{tpu_custom_call.1} parent=1 // pred_region
      %15 = vsyncadd [#allocation5], 0
      %s16 = sshll.u32 %s0, 4
      %s17 = int_to_ptr.hbm [resolvable:$true] %s16
      %s18 = sshll.u32 [#allocation4], 4
      %s19 = int_to_ptr.vmem [resolvable:$true] %s18
      %24 = dma.hbm_to_vmem [thread:$0]  %s17, 256, %s19, [#allocation5], 128, 128, 8
    $region5: #{tpu_custom_call.1} parent=1 // pred_fallthru
      _
    // Predicated region
    $region6: #{tpu_custom_call.1} parent=1 // pred_check
      _
    $region7: #{tpu_custom_call.1} parent=1 // pred_check_branch
      %26 = sbr.rel (0) target = $region9
    $region8: #{tpu_custom_call.1} parent=1 // pred_region
      _
    $region9: #{tpu_custom_call.1} parent=1 // pred_fallthru
      _
    // Predicated region
    $region10: #{tpu_custom_call.1} parent=1 // pred_check
      _
    $region11: #{tpu_custom_call.1} parent=1 // pred_check_branch
      %28 = sbr.rel (0) target = $region13
    $region12: #{tpu_custom_call.1} parent=1 // pred_region
      _
    $region13: #{tpu_custom_call.1} parent=1 // pred_fallthru
      _
    // Predicated region
    $region14: #{tpu_custom_call.1} parent=1 // pred_check
      _
    $region15: #{tpu_custom_call.1} parent=1 // pred_check_branch
      %30 = sbr.rel (0) target = $region17
    $region16: #{tpu_custom_call.1} parent=1 // pred_region
      _
    $region17: #{tpu_custom_call.1} parent=1 // pred_fallthru
      _
    // Predicated region
    $region18: #{tpu_custom_call.1} parent=1 // pred_check
      _
    $region19: #{tpu_custom_call.1} parent=1 // pred_check_branch
      %32 = sbr.rel (0) target = $region21
    $region20: #{tpu_custom_call.1} parent=1 // pred_region
      _
    $region21: #{tpu_custom_call.1} parent=1 // pred_fallthru
      _
    // Predicated region
    $region22: #{tpu_custom_call.1} parent=1 // pred_check
      _
    $region23: #{tpu_custom_call.1} parent=1 // pred_check_branch
      %34 = sbr.rel (0) target = $region25
    $region24: #{tpu_custom_call.1} parent=1 // pred_region
      %36 = dma.done [#allocation5], 256
    $region25: #{tpu_custom_call.1} parent=1 // pred_fallthru
      _
    %p37 = scmp.eq.s32.totalorder 0, 0
    // Predicated region
    $region26: #{tpu_custom_call.1} parent=1 // pred_check
      %p38 = pneg %p37
    $region27: #{tpu_custom_call.1} parent=1 // pred_check_branch
      %40 = sbr.rel (%p38) target = $region29
    $region28: #{tpu_custom_call.1} parent=1 // pred_region
      %41 = vst [vmem:[#allocation2] sm:$0xff] 0.0
      %42 = vst [vmem:[#allocation2 + $0x8] sm:$0xff] 0.0
      %vm43 = vcmask 64512
      %44 = vst.msk [vmem:[#allocation3] sm:$0xff] %vm43, 0.0
      %45 = vst.msk [vmem:[#allocation3 + $0x8] sm:$0xff] %vm43, 0.0
    $region29: #{tpu_custom_call.1} parent=1 // pred_fallthru
      _
    %v46 = vld [vmem:[#allocation4] sm:$0xff]
    %v47 = vld [vmem:[#allocation4 + $0x8] sm:$0xff]
    %v48 = vld [vmem:[#allocation2] sm:$0xff]
    %v49 = vld [vmem:[#allocation2 + $0x8] sm:$0xff]
    %v50 = vld [vmem:[%s1] sm:$0xff]
    %v51 = vld [vmem:[%s1 + $0x8] sm:$0xff]
    %v52 = vld [vmem:[%s1 + $0x10] sm:$0xff]
    %v53 = vld [vmem:[%s1 + $0x18] sm:$0xff]
    %v54 = vld [vmem:[%s1 + $0x20] sm:$0xff]
    %v55 = vld [vmem:[%s1 + $0x28] sm:$0xff]
    %v56 = vld [vmem:[%s1 + $0x30] sm:$0xff]
    %v57 = vld [vmem:[%s1 + $0x38] sm:$0xff]
    %v58 = vld [vmem:[%s1 + $0x40] sm:$0xff]
    %v59 = vld [vmem:[%s1 + $0x48] sm:$0xff]
    %v60 = vld [vmem:[%s1 + $0x50] sm:$0xff]
    %v61 = vld [vmem:[%s1 + $0x58] sm:$0xff]
    %v62 = vld [vmem:[%s1 + $0x60] sm:$0xff]
    %v63 = vld [vmem:[%s1 + $0x68] sm:$0xff]
    %v64 = vld [vmem:[%s1 + $0x70] sm:$0xff]
    %v65 = vld [vmem:[%s1 + $0x78] sm:$0xff]
    %66 = vmatpush.msra.mxu0 %v65
    %67 = vmatpush.msra.mxu0 %v64
    %68 = vmatpush.msra.mxu0 %v63
    %69 = vmatpush.msra.mxu0 %v62
    %70 = vmatpush.msra.mxu0 %v61
    %71 = vmatpush.msra.mxu0 %v60
    %72 = vmatpush.msra.mxu0 %v59
    %73 = vmatpush.msra.mxu0 %v58
    %74 = vmatpush.msra.mxu0 %v57
    %75 = vmatpush.msra.mxu0 %v56
    %76 = vmatpush.msra.mxu0 %v55
    %77 = vmatpush.msra.mxu0 %v54
    %78 = vmatpush.msra.mxu0 %v53
    %79 = vmatpush.msra.mxu0 %v52
    %80 = vmatpush.msra.mxu0 %v51
    %81 = vmatpush.msra.mxu0 %v50
    %82 = vmatmul.f32.gmra.mxu0 %v46
    %v83 = vpop.f32.mrf.mxu0
    %v84 = vadd.f32 0.0, %v83
    %85 = vmatmul.f32.gmra.mxu0 %v47
    %v86 = vpop.f32.mrf.mxu0
    %v87 = vadd.f32 0.0, %v86
    %88 = vdwg.mxu0
    %v89 = vadd.f32 %v48, %v84
    %v90 = vadd.f32 %v49, %v87
    %91 = vst [vmem:[#allocation2] sm:$0xff] %v89
    %92 = vst [vmem:[#allocation2 + $0x8] sm:$0xff] %v90
    %v93 = vld [vmem:[#allocation3] sm:$0xff]
    %v94 = vld [vmem:[#allocation3 + $0x8] sm:$0xff]
    %v95 = vld [vmem:[%s3] sm:$0xff]
    %v96 = vld [vmem:[%s3 + $0x8] sm:$0xff]
    %v97 = vld [vmem:[%s3 + $0x10] sm:$0xff]
    %v98 = vld [vmem:[%s3 + $0x18] sm:$0xff]
    %v99 = vld [vmem:[%s3 + $0x20] sm:$0xff]
    %v100 = vld [vmem:[%s3 + $0x28] sm:$0xff]
    %v101 = vld [vmem:[%s3 + $0x30] sm:$0xff]
    %v102 = vld [vmem:[%s3 + $0x38] sm:$0xff]
    %v103 = vld [vmem:[%s3 + $0x40] sm:$0xff]
    %v104 = vld [vmem:[%s3 + $0x48] sm:$0xff]
    %v105 = vld [vmem:[%s3 + $0x50] sm:$0xff]
    %v106 = vld [vmem:[%s3 + $0x58] sm:$0xff]
    %v107 = vld [vmem:[%s3 + $0x60] sm:$0xff]
    %v108 = vld [vmem:[%s3 + $0x68] sm:$0xff]
    %v109 = vld [vmem:[%s3 + $0x70] sm:$0xff]
    %v110 = vld [vmem:[%s3 + $0x78] sm:$0xff]
    %111 = vmatpush.msra.mxu0 %v110
    %112 = vmatpush.msra.mxu0 %v109
    %113 = vmatpush.msra.mxu0 %v108
    %114 = vmatpush.msra.mxu0 %v107
    %115 = vmatpush.msra.mxu0 %v106
    %116 = vmatpush.msra.mxu0 %v105
    %117 = vmatpush.msra.mxu0 %v104
    %118 = vmatpush.msra.mxu0 %v103
    %119 = vmatpush.msra.mxu0 %v102
    %120 = vmatpush.msra.mxu0 %v101
    %121 = vmatpush.msra.mxu0 %v100
    %122 = vmatpush.msra.mxu0 %v99
    %123 = vmatpush.msra.mxu0 %v98
    %124 = vmatpush.msra.mxu0 %v97
    %125 = vmatpush.msra.mxu0 %v96
    %126 = vmatpush.msra.mxu0 %v95
    %127 = vmatmul.f32.gmra.mxu0 %v46
    %v128 = vpop.f32.mrf.mxu0
    %v129 = vadd.f32 0.0, %v128
    %130 = vmatmul.f32.gmra.mxu0 %v47
    %v131 = vpop.f32.mrf.mxu0
    %v132 = vadd.f32 0.0, %v131
    %133 = vdwg.mxu0
    %v134 = vadd.f32 %v93, %v129
    %v135 = vadd.f32 %v94, %v132
    %vm136 = vcmask 64512
    %137 = vst.msk [vmem:[#allocation3] sm:$0xff] %vm136, %v134
    %138 = vst.msk [vmem:[#allocation3 + $0x8] sm:$0xff] %vm136, %v135
    // Predicated region
    $region30: #{tpu_custom_call.1} parent=1 // pred_check
      %p139 = pneg %p37
    $region31: #{tpu_custom_call.1} parent=1 // pred_check_branch
      %141 = sbr.rel (%p139) target = $region33
    $region32: #{tpu_custom_call.1} parent=1 // pred_region
      %v142 = vld [vmem:[#allocation3] sm:$0xff]
      %v143 = vld [vmem:[#allocation3 + $0x8] sm:$0xff]
      %v144 = vld [vmem:[%s4] sm:$0xff]
      %v146 = vsel %vm136, %v142, 0
      %v149 = vsel %vm136, %v143, 0
      %151 = vmatpush.msra.mxu0 0.0
      %152 = vmatpush.msra.mxu0 0.0
      %153 = vmatpush.msra.mxu0 0.0
      %154 = vmatpush.msra.mxu0 0.0
      %155 = vmatpush.msra.mxu0 0.0
      %156 = vmatpush.msra.mxu0 0.0
      %157 = vmatpush.msra.mxu0 0.0
      %158 = vmatpush.msra.mxu0 0.0
      %159 = vmatpush.msra.mxu0 0.0
      %160 = vmatpush.msra.mxu0 0.0
      %161 = vmatpush.msra.mxu0 0.0
      %162 = vmatpush.msra.mxu0 0.0
      %163 = vmatpush.msra.mxu0 0.0
      %164 = vmatpush.msra.mxu0 0.0
      %165 = vmatpush.msra.mxu0 0.0
      %166 = vmatpush.msra.mxu0 %v144
      %167 = vmatmul.f32.gmra.mxu0 %v146
      %v168 = vpop.f32.mrf.mxu0
      %v169 = vadd.f32 0.0, %v168
      %170 = vmatmul.f32.gmra.mxu0 %v149
      %v171 = vpop.f32.mrf.mxu0
      %v172 = vadd.f32 0.0, %v171
      %173 = vdwg.mxu0
      %v174 = vld [vmem:[#allocation2] sm:$0xff]
      %v175 = vld [vmem:[#allocation2 + $0x8] sm:$0xff]
      %v176 = vld [vmem:[%s2] sm:$0x1]
      %v178 = vperm.slane %v176, 0
      %v180 = vadd.f32 %v174, %v178
      %v181 = vadd.f32 %v175, %v178
      %v182 = vadd.f32 %v180, %v169
      %v183 = vadd.f32 %v181, %v172
      %v184 = vmax.f32 %v182, 0.0
      %v185 = vmax.f32 %v183, 0.0
      %186 = vst [vmem:[#allocation7] sm:$0xff] %v184
      %187 = vst [vmem:[#allocation7 + $0x8] sm:$0xff] %v185
    $region33: #{tpu_custom_call.1} parent=1 // pred_fallthru
      _
    // Predicated region
    $region34: #{tpu_custom_call.1} parent=1 // pred_check
      _
    $region35: #{tpu_custom_call.1} parent=1 // pred_check_branch
      %189 = sbr.rel (0) target = $region37
    $region36: #{tpu_custom_call.1} parent=1 // pred_region
      %191 = vsyncadd [#allocation6], 0
      %s192 = sshll.u32 [#allocation7], 4
      %s193 = int_to_ptr.vmem [resolvable:$true] %s192
      %s194 = sshll.u32 %s5, 4
      %s195 = int_to_ptr.hbm [resolvable:$true] %s194
      %200 = dma.vmem_to_hbm [thread:$0]  %s193, 256, %s195, [#allocation6], 128, 128, 8
    $region37: #{tpu_custom_call.1} parent=1 // pred_fallthru
      _
    // Predicated region
    $region38: #{tpu_custom_call.1} parent=1 // pred_check
      _
    $region39: #{tpu_custom_call.1} parent=1 // pred_check_branch
      %202 = sbr.rel (0) target = $region41
    $region40: #{tpu_custom_call.1} parent=1 // pred_region
      %204 = dma.done [#allocation6], 256
    $region41: #{tpu_custom_call.1} parent=1 // pred_fallthru
      _
    %205 = vsyncpa [#allocation5], 1
    %206 = vsyncpa [#allocation6], 1

</llo_original>
